<compile_context>
chip_gen: v5e
topology: v5e:2x2
jax: 0.10.0
libtpu: 0.0.40
codegen_flags: <defaults>
</compile_context>

<pallas_src>
import functools

import jax
import jax.numpy as jnp
from jax.experimental import pallas as pl
from jax.experimental.pallas import tpu as pltpu

_VMEM_LIMIT = 48 * 1024 * 1024  # leave headroom below v7x's 64 MiB physical VMEM


def _cp(dims):
    return pltpu.CompilerParams(dimension_semantics=dims,
                                vmem_limit_bytes=_VMEM_LIMIT)


def _round_up(x, q):
    return (x + q - 1) // q * q


def _plan_tiles(m, pref_m=512, pref_k=1024):
    """Row tile tm, K tile tk and padded node count Mp (tk % tm == 0, Mp % tk == 0)."""
    if m <= pref_m:
        t = _round_up(max(m, 8), 128)
        return t, t, t
    tm = pref_m
    tk = pref_k if m >= 2 * pref_k else pref_m
    return tm, tk, _round_up(m, tk)


# --------------------------- row L2-normalize kernel -------------------------
def _l2norm_kernel(x_ref, o_ref):
    x = x_ref[...].astype(jnp.float32)
    inv = jax.lax.rsqrt(jnp.maximum(jnp.sum(x * x, axis=-1, keepdims=True), 1e-24))
    o_ref[...] = (x * inv).astype(o_ref.dtype)


def pallas_l2norm(x, *, tm, out_dtype=jnp.bfloat16):
    m, f = x.shape
    spec = pl.BlockSpec((tm, f), lambda i: (i, 0))
    return pl.pallas_call(
        _l2norm_kernel,
        out_shape=jax.ShapeDtypeStruct((m, f), out_dtype),
        grid=(m // tm,),
        in_specs=[spec],
        out_specs=spec,
        compiler_params=_cp(("parallel",)),
    )(x)


# --- stage 1: mp(g,h), mp(g_high,h), 3 linears, L2-norms, partial combine ----
def _stage1_kernel(a2_ref, nk_ref, ni_ref, hk_ref, hi_ref, w_ref,
                   hp_lin_ref, part_ref, acc_ref, *, alpha, beta, gamma):
    # NOTE: program ids only at the top level (never inside pl.when bodies).
    k = pl.program_id(1)
    nk = pl.num_programs(1)

    @pl.when(k == 0)
    def _():
        acc_ref[...] = jnp.zeros_like(acc_ref)

    # D^{-1/2} column (source-node) scaling folded onto the dense operand.
    hk = hk_ref[...].astype(jnp.float32)                       # (tk, F)
    hg = (hk * nk_ref[0]).astype(jnp.bfloat16)                 # for graph g
    hh = (hk * nk_ref[1]).astype(jnp.bfloat16)                 # for graph g_high
    acc_ref[0] += jnp.dot(a2_ref[0].astype(jnp.bfloat16), hg,
                          preferred_element_type=jnp.float32)
    acc_ref[1] += jnp.dot(a2_ref[1].astype(jnp.bfloat16), hh,
                          preferred_element_type=jnp.float32)

    @pl.when(k == nk - 1)
    def _():
        def l2n(v):
            return v * jax.lax.rsqrt(
                jnp.maximum(jnp.sum(v * v, axis=-1, keepdims=True), 1e-24))

        # D^{-1/2} row (destination-node) scaling -> mp(g, h), mp(g_high, h)
        h_p = acc_ref[0] * ni_ref[0]                            # (tm, F) f32
        h_n = l2n(acc_ref[1] * ni_ref[1])                       # normalize(mp(g_high,h))
        w = w_ref[...]                                          # (F, Fo) bf16, resident
        hp_lin = jnp.dot(h_p.astype(jnp.bfloat16), w,
                         preferred_element_type=jnp.float32)
        hn_lin = jnp.dot(h_n.astype(jnp.bfloat16), w,
                         preferred_element_type=jnp.float32)
        hi_lin = jnp.dot(hi_ref[...], w, preferred_element_type=jnp.float32)
        # partial = beta*h_p_lin + gamma*normalize(-h_n_lin) + alpha*h_i_lin
        part_ref[...] = beta * hp_lin + gamma * l2n(-hn_lin) + alpha * hi_lin
        hp_lin_ref[...] = hp_lin.astype(hp_lin_ref.dtype)


def pallas_stage1(a2, norm2, h, wt, *, alpha, beta, gamma, tm, tk):
    _, mp_, _ = a2.shape
    f_in = h.shape[1]
    f_out = wt.shape[1]
    kernel = functools.partial(_stage1_kernel, alpha=alpha, beta=beta, gamma=gamma)
    return pl.pallas_call(
        kernel,
        out_shape=(jax.ShapeDtypeStruct((mp_, f_out), jnp.bfloat16),   # h_p_lin
                   jax.ShapeDtypeStruct((mp_, f_out), jnp.float32)),   # combine partial
        grid=(mp_ // tm, mp_ // tk),
        in_specs=[
            pl.BlockSpec((2, tm, tk), lambda i, k: (0, i, k)),   # raw int8 A_g/A_gh tile
            pl.BlockSpec((2, tk, 1), lambda i, k: (0, k, 0)),    # col scale (K slice)
            pl.BlockSpec((2, tm, 1), lambda i, k: (0, i, 0)),    # row scale (row slice)
            pl.BlockSpec((tk, f_in), lambda i, k: (k, 0)),       # h (K operand)
            pl.BlockSpec((tm, f_in), lambda i, k: (i, 0)),       # h (row operand, h_i)
            pl.BlockSpec((f_in, f_out), lambda i, k: (0, 0)),    # Wt (VMEM resident)
        ],
        out_specs=(pl.BlockSpec((tm, f_out), lambda i, k: (i, 0)),
                   pl.BlockSpec((tm, f_out), lambda i, k: (i, 0))),
        scratch_shapes=[pltpu.VMEM((2, tm, f_in), jnp.float32)],
        compiler_params=_cp(("parallel", "arbitrary")),
    )(a2, norm2, norm2, h, h, wt)


# --- stage 2: mp(g_high, h_p_lin) + "- delta*normalize" + BN(eval) + ReLU ----
def _stage2_kernel(agh_ref, nk_ref, ni_ref, hpk_ref, part_ref, bn_ref,
                   o_ref, acc_ref, *, delta, apply_bn_relu):
    k = pl.program_id(1)
    nk = pl.num_programs(1)

    @pl.when(k == 0)
    def _():
        acc_ref[...] = jnp.zeros_like(acc_ref)

    hpk = (hpk_ref[...].astype(jnp.float32) * nk_ref[...]).astype(jnp.bfloat16)
    acc_ref[...] += jnp.dot(agh_ref[...].astype(jnp.bfloat16), hpk,
                            preferred_element_type=jnp.float32)

    @pl.when(k == nk - 1)
    def _():
        h_d = acc_ref[...] * ni_ref[...]
        h_d = h_d * jax.lax.rsqrt(
            jnp.maximum(jnp.sum(h_d * h_d, axis=-1, keepdims=True), 1e-24))
        y = part_ref[...] - delta * h_d
        if apply_bn_relu:
            bn = bn_ref[...]                                    # (2, Fo): scale, shift
            y = jnp.maximum(y * bn[0:1, :] + bn[1:2, :], 0.0)
        o_ref[...] = y.astype(o_ref.dtype)


def pallas_stage2(a2, norm2, hp_lin, part, bn_packed, *, delta, apply_bn_relu,
                  out_dtype, tm, tk):
    _, mp_, _ = a2.shape
    f_out = hp_lin.shape[1]
    kernel = functools.partial(_stage2_kernel, delta=delta,
                               apply_bn_relu=apply_bn_relu)
    return pl.pallas_call(
        kernel,
        out_shape=jax.ShapeDtypeStruct((mp_, f_out), out_dtype),
        grid=(mp_ // tm, mp_ // tk),
        in_specs=[
            pl.BlockSpec((None, tm, tk), lambda i, k: (1, i, k)),   # A_gh tile (slot 1)
            pl.BlockSpec((None, tk, 1), lambda i, k: (1, k, 0)),    # col scale (g_high)
            pl.BlockSpec((None, tm, 1), lambda i, k: (1, i, 0)),    # row scale (g_high)
            pl.BlockSpec((tk, f_out), lambda i, k: (k, 0)),         # h_p_lin (K operand)
            pl.BlockSpec((tm, f_out), lambda i, k: (i, 0)),         # combine partial
            pl.BlockSpec((2, f_out), lambda i, k: (0, 0)),          # BN scale/shift
        ],
        out_specs=pl.BlockSpec((tm, f_out), lambda i, k: (i, 0)),
        scratch_shapes=[pltpu.VMEM((tm, f_out), jnp.float32)],
        compiler_params=_cp(("parallel", "arbitrary")),
    )(a2, norm2, norm2, hp_lin, part, bn_packed)


# ------------------------------- GOAL forward --------------------------------
def goal_forward(A_g, A_gh, features, weights, bn_params,
                 alpha, beta, gamma, delta, *, pref_tm=512, pref_tk=1024):
    bf = jnp.bfloat16
    m, f_in = features.shape
    tm, tk, mp_ = _plan_tiles(m, pref_tm, pref_tk)

    # ---- one-time per-graph glue (host side) --------------------------------
    # raw 0/1 adjacency as int8; D^{-1/2} scaling applied inside the kernels
    a2 = jnp.zeros((2, mp_, mp_), jnp.int8)
    a2 = a2.at[0, :m, :m].set(A_g.astype(jnp.int8))
    a2 = a2.at[1, :m, :m].set(A_gh.astype(jnp.int8))

    def inv_sqrt_deg(a):
        return jax.lax.rsqrt(jnp.maximum(jnp.sum(a, axis=1), 1.0))

    norm2 = jnp.ones((2, mp_, 1), jnp.float32)
    norm2 = norm2.at[0, :m, 0].set(inv_sqrt_deg(A_g))
    norm2 = norm2.at[1, :m, 0].set(inv_sqrt_deg(A_gh))

    # pad all feature dims to multiples of 128 lanes (final layer 32 -> 128)
    dims = [f_in] + [w.shape[0] for w in weights]
    pdims = [_round_up(d, 128) for d in dims]
    x = jnp.zeros((mp_, pdims[0]), jnp.float32).at[:m, :f_in].set(features)

    wts, bns = [], []
    for i, w in enumerate(weights):
        fo, fi = w.shape
        wt = jnp.zeros((pdims[i], pdims[i + 1]), bf).at[:fi, :fo].set(w.T.astype(bf))
        wts.append(wt)
        if i < len(bn_params):
            bw, bb, rm, rv = bn_params[i]
            scale = bw * jax.lax.rsqrt(rv + 1e-5)          # PyTorch BN eps, eval mode
            shift = bb - rm * scale
            packed = jnp.zeros((2, pdims[i + 1]), jnp.float32)
            packed = packed.at[0, :fo].set(scale).at[1, :fo].set(shift)
            bns.append(packed)

    num_layers = len(weights)
    h = pallas_l2norm(x, tm=tm)                            # F.normalize(features)
    for i in range(num_layers):
        apply_bn = (i < 2) and (i < len(bns))
        hp_lin, part = pallas_stage1(a2, norm2, h, wts[i],
                                     alpha=float(alpha), beta=float(beta),
                                     gamma=float(gamma), tm=tm, tk=tk)
        bn_packed = bns[i] if apply_bn else jnp.zeros((2, wts[i].shape[1]),
                                                      jnp.float32)
        out_dtype = bf if i < num_layers - 1 else jnp.float32
        h = pallas_stage2(a2, norm2, hp_lin, part, bn_packed,
                          delta=float(delta), apply_bn_relu=apply_bn,
                          out_dtype=out_dtype, tm=tm, tk=tk)
        # TODO(synk): dropout is identity (inference mode)
    return h[:m, :weights[-1].shape[0]]


# --------------------------- pure-JAX references ------------------------------
def ref_forward_f32(A_g, A_gh, features, weights, bn_params,
                    alpha, beta, gamma, delta):
    """Exact f32 PyTorch semantics (F.normalize eps on the norm)."""
    def l2n(x):
        n = jnp.sqrt(jnp.sum(x * x, axis=-1, keepdims=True))
        return x / jnp.maximum(n, 1e-12)

    def sym(a):
        nrm = jnp.power(jnp.maximum(jnp.sum(a, axis=1), 1.0), -0.5)
        return nrm[:, None] * a * nrm[None, :]

    ahg, ahh = sym(A_g), sym(A_gh)
    h = l2n(features)
    for i, w in enumerate(weights):
        wt = w.T
        h_p = (ahg @ h) @ wt
        h_n = -(l2n(ahh @ h) @ wt)
        h_i = h @ wt
        h = beta * h_p + gamma * l2n(h_n) + alpha * h_i - delta * l2n(ahh @ h_p)
        if i < 2:
            bw, bb, rm, rv = bn_params[i]
            h = (h - rm) / jnp.sqrt(rv + 1e-5) * bw + bb
            h = jnp.maximum(h, 0.0)
    return h


def ref_forward_mixed(A_g, A_gh, features, weights, bn_params,
                      alpha, beta, gamma, delta):
    """Same dtype policy as the Pallas path (bf16 MXU operands, f32 accumulate)."""
    bf = jnp.bfloat16

    def l2n(x):
        return x * jax.lax.rsqrt(
            jnp.maximum(jnp.sum(x * x, axis=-1, keepdims=True), 1e-24))

    def mm(a, b):
        return jnp.dot(a, b, preferred_element_type=jnp.float32)

    def inv_sqrt_deg(a):
        return jax.lax.rsqrt(jnp.maximum(jnp.sum(a, axis=1), 1.0))

    ng = inv_sqrt_deg(A_g)[:, None]
    nh = inv_sqrt_deg(A_gh)[:, None]
    ag = A_g.astype(jnp.int8).astype(bf)
    ah = A_gh.astype(jnp.int8).astype(bf)

    n = len(weights)
    h = l2n(features.astype(jnp.float32)).astype(bf)
    for i, w in enumerate(weights):
        wt = w.T.astype(bf)
        hf = h.astype(jnp.float32)
        h_p = mm(ag, (hf * ng).astype(bf)) * ng           # mp(g, h), f32
        h_nm = l2n(mm(ah, (hf * nh).astype(bf)) * nh)     # normalize(mp(g_high, h))
        hp_lin = mm(h_p.astype(bf), wt)
        hn_lin = mm(h_nm.astype(bf), wt)
        hi_lin = mm(h, wt)
        part = beta * hp_lin + gamma * l2n(-hn_lin) + alpha * hi_lin
        hpb = hp_lin.astype(bf)
        h_d = mm(ah, (hpb.astype(jnp.float32) * nh).astype(bf)) * nh
        y = part - delta * l2n(h_d)
        if i < 2:
            bw, bb, rm, rv = bn_params[i]
            scale = bw * jax.lax.rsqrt(rv + 1e-5)
            shift = bb - rm * scale
            y = jnp.maximum(y * scale + shift, 0.0)
        h = y.astype(bf) if i < n - 1 else y
    return h


# ----------------------------------- main ------------------------------------
if __name__ == "__main__":
    key = jax.random.PRNGKey(0)
    num_nodes, in_size, hid_size, out_size, num_layer = 128, 64, 128, 32, 3

    keys = jax.random.split(key, 12)

    # graphs (dense adjacency, deterministic)
    A_g = (jax.random.uniform(keys[0], (num_nodes, num_nodes)) < 0.05
           ).astype(jnp.float32)
    A_gh = (jax.random.uniform(keys[1], (num_nodes, num_nodes)) < 0.05
            ).astype(jnp.float32)

    # node features
    features = jax.random.normal(keys[2], (num_nodes, in_size), jnp.float32)

    # linear weights: layers = [in->hid, hid->hid, hid->out], no bias
    dims = [in_size] + [hid_size] * (num_layer - 1) + [out_size]
    weights = []
    for li in range(num_layer):
        fan_in, fan_out = dims[li], dims[li + 1]
        W = jax.random.normal(keys[3 + li], (fan_out, fan_in), jnp.float32)
        weights.append(W / jnp.sqrt(jnp.float32(fan_in)))

    # BatchNorm1d(hid_size) params (eval mode): weight, bias, running_mean/var
    bn_params = []
    for bi in range(num_layer - 1):
        kw, kb, km, kv = jax.random.split(keys[3 + num_layer + bi], 4)
        bw = 1.0 + 0.1 * jax.random.normal(kw, (hid_size,), jnp.float32)
        bb = 0.1 * jax.random.normal(kb, (hid_size,), jnp.float32)
        rm = 0.1 * jax.random.normal(km, (hid_size,), jnp.float32)
        rv = 0.5 + jax.random.uniform(kv, (hid_size,), jnp.float32)
        bn_params.append((bw, bb, rm, rv))

    alpha, beta, gamma, delta = 0.7, 0.5, 0.3, 0.2

    out = jax.block_until_ready(
        goal_forward(A_g, A_gh, features, weights, bn_params,
                     alpha, beta, gamma, delta))
    assert out.shape == (num_nodes, out_size), out.shape

    # 1) tight check against a reference with the identical bf16/f32 policy
    ref_mix = jax.block_until_ready(
        ref_forward_mixed(A_g, A_gh, features, weights, bn_params,
                          alpha, beta, gamma, delta))
    err_impl = float(jnp.max(jnp.abs(out - ref_mix)))
    assert err_impl < 2e-2, f"kernel impl max abs error {err_impl}"

    # 2) loose check against the exact f32 reference (bounds bf16 quantization)
    ref32 = jax.block_until_ready(
        ref_forward_f32(A_g, A_gh, features, weights, bn_params,
                        alpha, beta, gamma, delta))
    rel_err = float(jnp.linalg.norm(out - ref32) / jnp.linalg.norm(ref32))
    assert rel_err < 5e-2, f"relative Frobenius error vs f32 ref {rel_err}"

    print("KERNEL_OK")
</pallas_src>

<mosaic_0001>
module attributes {stable_mosaic.version = 11 : i64} {
  func.func @_l2norm_kernel(%arg0: i32, %arg1: memref<128x128xf32, #tpu.memory_space<vmem>>, %arg2: memref<128x128xbf16, #tpu.memory_space<vmem>>) attributes {dimension_semantics = [#tpu.dimension_semantics<parallel>], iteration_bounds = array<i64: 1>, scalar_prefetch = 0 : i64, scratch_operands = 0 : i64, tpu.core_type = #tpu.core_type<tc>, window_params = [{transform_indices = @transform_0, window_bounds = array<i64: 128, 128>}, {transform_indices = @transform_1, window_bounds = array<i64: 128, 128>}]} {
    %c0 = arith.constant 0 : index
    %c0_0 = arith.constant 0 : index
    %0 = vector.load %arg1[%c0, %c0_0] : memref<128x128xf32, #tpu.memory_space<vmem>>, vector<128x128xf32>
    %1 = arith.mulf %0, %0 : vector<128x128xf32>
    %cst = arith.constant dense<0.000000e+00> : vector<128xf32>
    %2 = vector.multi_reduction <add>, %1, %cst [1] : vector<128x128xf32> to vector<128xf32>
    %3 = vector.shape_cast %2 : vector<128xf32> to vector<128x1xf32>
    %cst_1 = arith.constant 1.000000e-24 : f32
    %4 = vector.broadcast %cst_1 : f32 to vector<128x1xf32>
    %5 = arith.maximumf %3, %4 : vector<128x1xf32>
    %6 = math.rsqrt %5 : vector<128x1xf32>
    %7 = vector.broadcast %6 : vector<128x1xf32> to vector<128x128xf32>
    %8 = arith.mulf %0, %7 : vector<128x128xf32>
    %9 = arith.truncf %8 : vector<128x128xf32> to vector<128x128xbf16>
    %c0_2 = arith.constant 0 : index
    %c0_3 = arith.constant 0 : index
    %10 = vector.load %arg2[%c0_2, %c0_3] : memref<128x128xbf16, #tpu.memory_space<vmem>>, vector<128x128xbf16>
    tpu.vector_store %arg2[%c0_2, %c0_3], %9 {strides = array<i32>} : memref<128x128xbf16, #tpu.memory_space<vmem>>, vector<128x128xbf16>,
    return
  }
  func.func @transform_0(%arg0: i32) -> (i32, i32) {
    %c0_i32 = arith.constant 0 : i32
    %c0_i32_0 = arith.constant 0 : i32
    return %arg0, %c0_i32 : i32, i32
  }
  func.func @transform_1(%arg0: i32) -> (i32, i32) {
    %c0_i32 = arith.constant 0 : i32
    %c0_i32_0 = arith.constant 0 : i32
    return %arg0, %c0_i32 : i32, i32
  }
}

</mosaic_0001>

<llo_original>
// kernel: tpu_custom_call.1
$region0: #{tpu_custom_call.1}
  #allocation0 [shape = 'u32[]', space=smem, size = 0x4, offset = 0x4, fixed_abs, tag = 'smem constant byte address 0x4 - core index']
  #allocation1 [shape = 'u32[72,128]{1,0:T(1,128)}', space=vmem, size = 0x9000, scoped, tag = 'internal scratch']
  %s0 = inlined_call_operand.hbm [shape: f32[128,128], index: 0, kind: input, shape index: {}]
  %s1 = inlined_call_operand.hbm [shape: bf16[128,128], index: 1, kind: output, shape index: {}]
  %s2 = sld [smem:[#allocation0]]
  $region18: #{tpu_custom_call.1} parent=0
    _
  %s4 = ssub.s32 1, %s2
  %s5 = scalar_select 0, %s4, %s2
  $region1: #{tpu_custom_call.1} parent=0
    #allocation2 [shape = 'u8[65536]{0}', space=vmem, size = 0x10000, scoped, tag = 'input window, operand 0, single buffered']
    #allocation3 [shape = 's32[1]{0}', space=sflag, size = 0x4, scoped, tag = 'scoped memory for tpu_custom_call.1']
    #allocation4 [shape = 's32[1]{0}', space=sflag, size = 0x4, scoped, tag = 'scoped memory for tpu_custom_call.1']
    #allocation5 [shape = 'u8[32768]{0}', space=vmem, size = 0x8000, scoped, tag = 'output window, operand 0, single buffered']
    %6 = vsyncpa [#allocation3], 0
    %7 = vsyncpa [#allocation4], 0
    // Predicated region
    $region2: #{tpu_custom_call.1} parent=1 // pred_check
      _
    $region3: #{tpu_custom_call.1} parent=1 // pred_check_branch
      %9 = sbr.rel (0) target = $region5
    $region4: #{tpu_custom_call.1} parent=1 // pred_region
      %11 = vsyncadd [#allocation3], 0
      %s12 = sshll.u32 %s0, 4
      %s13 = int_to_ptr.hbm [resolvable:$true] %s12
      %s14 = sshll.u32 [#allocation2], 4
      %s15 = int_to_ptr.vmem [resolvable:$true] %s14
      %20 = dma.hbm_to_vmem [thread:$0]  %s13, 2048, %s15, [#allocation3], 128, 128, 8
    $region5: #{tpu_custom_call.1} parent=1 // pred_fallthru
      _
    // Predicated region
    $region6: #{tpu_custom_call.1} parent=1 // pred_check
      _
    $region7: #{tpu_custom_call.1} parent=1 // pred_check_branch
      %22 = sbr.rel (0) target = $region9
    $region8: #{tpu_custom_call.1} parent=1 // pred_region
      %24 = dma.done [#allocation3], 2048
    $region9: #{tpu_custom_call.1} parent=1 // pred_fallthru
      _
    %v25 = vld [vmem:[#allocation2] sm:$0xff]
    %v26 = vld [vmem:[#allocation2 + $0x8] sm:$0xff]
    %v27 = vld [vmem:[#allocation2 + $0x10] sm:$0xff]
    %v28 = vld [vmem:[#allocation2 + $0x18] sm:$0xff]
    %v29 = vld [vmem:[#allocation2 + $0x20] sm:$0xff]
    %v30 = vld [vmem:[#allocation2 + $0x28] sm:$0xff]
    %v31 = vld [vmem:[#allocation2 + $0x30] sm:$0xff]
    %v32 = vld [vmem:[#allocation2 + $0x38] sm:$0xff]
    %v33 = vld [vmem:[#allocation2 + $0x40] sm:$0xff]
    %v34 = vld [vmem:[#allocation2 + $0x48] sm:$0xff]
    %v35 = vld [vmem:[#allocation2 + $0x50] sm:$0xff]
    %v36 = vld [vmem:[#allocation2 + $0x58] sm:$0xff]
    %v37 = vld [vmem:[#allocation2 + $0x60] sm:$0xff]
    %v38 = vld [vmem:[#allocation2 + $0x68] sm:$0xff]
    %v39 = vld [vmem:[#allocation2 + $0x70] sm:$0xff]
    %v40 = vld [vmem:[#allocation2 + $0x78] sm:$0xff]
    %v41 = vmul.f32 %v25, %v25
    %v42 = vmul.f32 %v26, %v26
    %v43 = vmul.f32 %v27, %v27
    %v44 = vmul.f32 %v28, %v28
    %v45 = vmul.f32 %v29, %v29
    %v46 = vmul.f32 %v30, %v30
    %v47 = vmul.f32 %v31, %v31
    %v48 = vmul.f32 %v32, %v32
    %v49 = vmul.f32 %v33, %v33
    %v50 = vmul.f32 %v34, %v34
    %v51 = vmul.f32 %v35, %v35
    %v52 = vmul.f32 %v36, %v36
    %v53 = vmul.f32 %v37, %v37
    %v54 = vmul.f32 %v38, %v38
    %v55 = vmul.f32 %v39, %v39
    %v56 = vmul.f32 %v40, %v40
    %57 = vadd.xlane.f32.xlu0 %v41
    %v58 = vpop.xlane.xlu0 %57
    %59 = vadd.xlane.f32.xlu0 %v42
    %v60 = vpop.xlane.xlu0 %59
    %61 = vadd.xlane.f32.xlu0 %v43
    %v62 = vpop.xlane.xlu0 %61
    %63 = vadd.xlane.f32.xlu0 %v44
    %v64 = vpop.xlane.xlu0 %63
    %65 = vadd.xlane.f32.xlu0 %v45
    %v66 = vpop.xlane.xlu0 %65
    %67 = vadd.xlane.f32.xlu0 %v46
    %v68 = vpop.xlane.xlu0 %67
    %69 = vadd.xlane.f32.xlu0 %v47
    %v70 = vpop.xlane.xlu0 %69
    %71 = vadd.xlane.f32.xlu0 %v48
    %v72 = vpop.xlane.xlu0 %71
    %73 = vadd.xlane.f32.xlu0 %v49
    %v74 = vpop.xlane.xlu0 %73
    %75 = vadd.xlane.f32.xlu0 %v50
    %v76 = vpop.xlane.xlu0 %75
    %77 = vadd.xlane.f32.xlu0 %v51
    %v78 = vpop.xlane.xlu0 %77
    %79 = vadd.xlane.f32.xlu0 %v52
    %v80 = vpop.xlane.xlu0 %79
    %81 = vadd.xlane.f32.xlu0 %v53
    %v82 = vpop.xlane.xlu0 %81
    %83 = vadd.xlane.f32.xlu0 %v54
    %v84 = vpop.xlane.xlu0 %83
    %85 = vadd.xlane.f32.xlu0 %v55
    %v86 = vpop.xlane.xlu0 %85
    %87 = vadd.xlane.f32.xlu0 %v56
    %v88 = vpop.xlane.xlu0 %87
    %v89 = vmax.f32 %v58, 1e-24
    %v90 = vmax.f32 %v60, 1e-24
    %v91 = vmax.f32 %v62, 1e-24
    %v92 = vmax.f32 %v64, 1e-24
    %v93 = vmax.f32 %v66, 1e-24
    %v94 = vmax.f32 %v68, 1e-24
    %v95 = vmax.f32 %v70, 1e-24
    %v96 = vmax.f32 %v72, 1e-24
    %v97 = vmax.f32 %v74, 1e-24
    %v98 = vmax.f32 %v76, 1e-24
    %v99 = vmax.f32 %v78, 1e-24
    %v100 = vmax.f32 %v80, 1e-24
    %v101 = vmax.f32 %v82, 1e-24
    %v102 = vmax.f32 %v84, 1e-24
    %v103 = vmax.f32 %v86, 1e-24
    %v104 = vmax.f32 %v88, 1e-24
    %v105 = vrsqrt.pop %v89
    %v106 = vmul.f32 %v105, %v89
    %v107 = vmul.f32 %v106, %v105
    %v108 = vmul.f32 0.5, %v107
    %v109 = vsub.f32 1.5, %v108
    %v110 = vmul.f32 %v105, %v109
    %vm111 = vweird.f32 %v89
    %vm112 = vweird.f32 %v105
    %vm113 = vmor %vm111, %vm112
    %v114 = vsel %vm113, %v105, %v110
    %v115 = vrsqrt.pop %v90
    %v116 = vmul.f32 %v115, %v90
    %v117 = vmul.f32 %v116, %v115
    %v118 = vmul.f32 0.5, %v117
    %v119 = vsub.f32 1.5, %v118
    %v120 = vmul.f32 %v115, %v119
    %vm121 = vweird.f32 %v90
    %vm122 = vweird.f32 %v115
    %vm123 = vmor %vm121, %vm122
    %v124 = vsel %vm123, %v115, %v120
    %v125 = vrsqrt.pop %v91
    %v126 = vmul.f32 %v125, %v91
    %v127 = vmul.f32 %v126, %v125
    %v128 = vmul.f32 0.5, %v127
    %v129 = vsub.f32 1.5, %v128
    %v130 = vmul.f32 %v125, %v129
    %vm131 = vweird.f32 %v91
    %vm132 = vweird.f32 %v125
    %vm133 = vmor %vm131, %vm132
    %v134 = vsel %vm133, %v125, %v130
    %v135 = vrsqrt.pop %v92
    %v136 = vmul.f32 %v135, %v92
    %v137 = vmul.f32 %v136, %v135
    %v138 = vmul.f32 0.5, %v137
    %v139 = vsub.f32 1.5, %v138
    %v140 = vmul.f32 %v135, %v139
    %vm141 = vweird.f32 %v92
    %vm142 = vweird.f32 %v135
    %vm143 = vmor %vm141, %vm142
    %v144 = vsel %vm143, %v135, %v140
    %v145 = vrsqrt.pop %v93
    %v146 = vmul.f32 %v145, %v93
    %v147 = vmul.f32 %v146, %v145
    %v148 = vmul.f32 0.5, %v147
    %v149 = vsub.f32 1.5, %v148
    %v150 = vmul.f32 %v145, %v149
    %vm151 = vweird.f32 %v93
    %vm152 = vweird.f32 %v145
    %vm153 = vmor %vm151, %vm152
    %v154 = vsel %vm153, %v145, %v150
    %v155 = vrsqrt.pop %v94
    %v156 = vmul.f32 %v155, %v94
    %v157 = vmul.f32 %v156, %v155
    %v158 = vmul.f32 0.5, %v157
    %v159 = vsub.f32 1.5, %v158
    %v160 = vmul.f32 %v155, %v159
    %vm161 = vweird.f32 %v94
    %vm162 = vweird.f32 %v155
    %vm163 = vmor %vm161, %vm162
    %v164 = vsel %vm163, %v155, %v160
    %v165 = vrsqrt.pop %v95
    %v166 = vmul.f32 %v165, %v95
    %v167 = vmul.f32 %v166, %v165
    %v168 = vmul.f32 0.5, %v167
    %v169 = vsub.f32 1.5, %v168
    %v170 = vmul.f32 %v165, %v169
    %vm171 = vweird.f32 %v95
    %vm172 = vweird.f32 %v165
    %vm173 = vmor %vm171, %vm172
    %v174 = vsel %vm173, %v165, %v170
    %v175 = vrsqrt.pop %v96
    %v176 = vmul.f32 %v175, %v96
    %v177 = vmul.f32 %v176, %v175
    %v178 = vmul.f32 0.5, %v177
    %v179 = vsub.f32 1.5, %v178
    %v180 = vmul.f32 %v175, %v179
    %vm181 = vweird.f32 %v96
    %vm182 = vweird.f32 %v175
    %vm183 = vmor %vm181, %vm182
    %v184 = vsel %vm183, %v175, %v180
    %v185 = vrsqrt.pop %v97
    %v186 = vmul.f32 %v185, %v97
    %v187 = vmul.f32 %v186, %v185
    %v188 = vmul.f32 0.5, %v187
    %v189 = vsub.f32 1.5, %v188
    %v190 = vmul.f32 %v185, %v189
    %vm191 = vweird.f32 %v97
    %vm192 = vweird.f32 %v185
    %vm193 = vmor %vm191, %vm192
    %v194 = vsel %vm193, %v185, %v190
    %v195 = vrsqrt.pop %v98
    %v196 = vmul.f32 %v195, %v98
    %v197 = vmul.f32 %v196, %v195
    %v198 = vmul.f32 0.5, %v197
    %v199 = vsub.f32 1.5, %v198
    %v200 = vmul.f32 %v195, %v199
    %vm201 = vweird.f32 %v98
    %vm202 = vweird.f32 %v195
    %vm203 = vmor %vm201, %vm202
    %v204 = vsel %vm203, %v195, %v200
    %v205 = vrsqrt.pop %v99
    %v206 = vmul.f32 %v205, %v99
    %v207 = vmul.f32 %v206, %v205
    %v208 = vmul.f32 0.5, %v207
    %v209 = vsub.f32 1.5, %v208
    %v210 = vmul.f32 %v205, %v209
    %vm211 = vweird.f32 %v99
    %vm212 = vweird.f32 %v205
    %vm213 = vmor %vm211, %vm212
    %v214 = vsel %vm213, %v205, %v210
    %v215 = vrsqrt.pop %v100
    %v216 = vmul.f32 %v215, %v100
    %v217 = vmul.f32 %v216, %v215
    %v218 = vmul.f32 0.5, %v217
    %v219 = vsub.f32 1.5, %v218
    %v220 = vmul.f32 %v215, %v219
    %vm221 = vweird.f32 %v100
    %vm222 = vweird.f32 %v215
    %vm223 = vmor %vm221, %vm222
    %v224 = vsel %vm223, %v215, %v220
    %v225 = vrsqrt.pop %v101
    %v226 = vmul.f32 %v225, %v101
    %v227 = vmul.f32 %v226, %v225
    %v228 = vmul.f32 0.5, %v227
    %v229 = vsub.f32 1.5, %v228
    %v230 = vmul.f32 %v225, %v229
    %vm231 = vweird.f32 %v101
    %vm232 = vweird.f32 %v225
    %vm233 = vmor %vm231, %vm232
    %v234 = vsel %vm233, %v225, %v230
    %v235 = vrsqrt.pop %v102
    %v236 = vmul.f32 %v235, %v102
    %v237 = vmul.f32 %v236, %v235
    %v238 = vmul.f32 0.5, %v237
    %v239 = vsub.f32 1.5, %v238
    %v240 = vmul.f32 %v235, %v239
    %vm241 = vweird.f32 %v102
    %vm242 = vweird.f32 %v235
    %vm243 = vmor %vm241, %vm242
    %v244 = vsel %vm243, %v235, %v240
    %v245 = vrsqrt.pop %v103
    %v246 = vmul.f32 %v245, %v103
    %v247 = vmul.f32 %v246, %v245
    %v248 = vmul.f32 0.5, %v247
    %v249 = vsub.f32 1.5, %v248
    %v250 = vmul.f32 %v245, %v249
    %vm251 = vweird.f32 %v103
    %vm252 = vweird.f32 %v245
    %vm253 = vmor %vm251, %vm252
    %v254 = vsel %vm253, %v245, %v250
    %v255 = vrsqrt.pop %v104
    %v256 = vmul.f32 %v255, %v104
    %v257 = vmul.f32 %v256, %v255
    %v258 = vmul.f32 0.5, %v257
    %v259 = vsub.f32 1.5, %v258
    %v260 = vmul.f32 %v255, %v259
    %vm261 = vweird.f32 %v104
    %vm262 = vweird.f32 %v255
    %vm263 = vmor %vm261, %vm262
    %v264 = vsel %vm263, %v255, %v260
    %v265 = vmul.f32 %v25, %v114
    %v266 = vmul.f32 %v26, %v124
    %v267 = vmul.f32 %v27, %v134
    %v268 = vmul.f32 %v28, %v144
    %v269 = vmul.f32 %v29, %v154
    %v270 = vmul.f32 %v30, %v164
    %v271 = vmul.f32 %v31, %v174
    %v272 = vmul.f32 %v32, %v184
    %v273 = vmul.f32 %v33, %v194
    %v274 = vmul.f32 %v34, %v204
    %v275 = vmul.f32 %v35, %v214
    %v276 = vmul.f32 %v36, %v224
    %v277 = vmul.f32 %v37, %v234
    %v278 = vmul.f32 %v38, %v244
    %v279 = vmul.f32 %v39, %v254
    %v280 = vmul.f32 %v40, %v264
    %v281 = vpack.c.bf16 %v265, %v265
    %v282 = vpack.c.bf16 %v266, %v266
    %v283 = vpack.c.bf16 %v267, %v267
    %v284 = vpack.c.bf16 %v268, %v268
    %v285 = vpack.c.bf16 %v269, %v269
    %v286 = vpack.c.bf16 %v270, %v270
    %v287 = vpack.c.bf16 %v271, %v271
    %v288 = vpack.c.bf16 %v272, %v272
    %v289 = vpack.c.bf16 %v273, %v273
    %v290 = vpack.c.bf16 %v274, %v274
    %v291 = vpack.c.bf16 %v275, %v275
    %v292 = vpack.c.bf16 %v276, %v276
    %v293 = vpack.c.bf16 %v277, %v277
    %v294 = vpack.c.bf16 %v278, %v278
    %v295 = vpack.c.bf16 %v279, %v279
    %v296 = vpack.c.bf16 %v280, %v280
    %297 = vst [vmem:[#allocation5] sm:$0xf] %v281
    %298 = vst [vmem:[#allocation5 + $0x4] sm:$0xf] %v282
    %299 = vst [vmem:[#allocation5 + $0x8] sm:$0xf] %v283
    %300 = vst [vmem:[#allocation5 + $0xc] sm:$0xf] %v284
    %301 = vst [vmem:[#allocation5 + $0x10] sm:$0xf] %v285
    %302 = vst [vmem:[#allocation5 + $0x14] sm:$0xf] %v286
    %303 = vst [vmem:[#allocation5 + $0x18] sm:$0xf] %v287
    %304 = vst [vmem:[#allocation5 + $0x1c] sm:$0xf] %v288
    %305 = vst [vmem:[#allocation5 + $0x20] sm:$0xf] %v289
    %306 = vst [vmem:[#allocation5 + $0x24] sm:$0xf] %v290
    %307 = vst [vmem:[#allocation5 + $0x28] sm:$0xf] %v291
    %308 = vst [vmem:[#allocation5 + $0x2c] sm:$0xf] %v292
    %309 = vst [vmem:[#allocation5 + $0x30] sm:$0xf] %v293
    %310 = vst [vmem:[#allocation5 + $0x34] sm:$0xf] %v294
    %311 = vst [vmem:[#allocation5 + $0x38] sm:$0xf] %v295
    %312 = vst [vmem:[#allocation5 + $0x3c] sm:$0xf] %v296
    // Predicated region
    $region10: #{tpu_custom_call.1} parent=1 // pred_check
      _
    $region11: #{tpu_custom_call.1} parent=1 // pred_check_branch
      %314 = sbr.rel (0) target = $region13
    $region12: #{tpu_custom_call.1} parent=1 // pred_region
      %316 = vsyncadd [#allocation4], 0
      %s317 = sshll.u32 [#allocation5], 4
      %s318 = int_to_ptr.vmem [resolvable:$true] %s317
      %s319 = sshll.u32 %s1, 4
      %s320 = int_to_ptr.hbm [resolvable:$true] %s319
      %325 = dma.vmem_to_hbm [thread:$0]  %s318, 1024, %s320, [#allocation4], 64, 64, 4
    $region13: #{tpu_custom_call.1} parent=1 // pred_fallthru
      _
    // Predicated region
    $region14: #{tpu_custom_call.1} parent=1 // pred_check
      _
    $region15: #{tpu_custom_call.1} parent=1 // pred_check_branch
      %327 = sbr.rel (0) target = $region17
    $region16: #{tpu_custom_call.1} parent=1 // pred_region
      %329 = dma.done [#allocation4], 1024
    $region17: #{tpu_custom_call.1} parent=1 // pred_fallthru
      _
    %330 = vsyncpa [#allocation3], 1
    %331 = vsyncpa [#allocation4], 1

</llo_original>
